<compile_context>
chip_gen: v5e
topology: v5e:2x2
jax: 0.10.0
libtpu: 0.0.40
codegen_flags: <defaults>
</compile_context>

<pallas_src>
import jax
import jax.numpy as jnp
from jax.experimental import pallas as pl
from jax.experimental.pallas import tpu as pltpu

LN_EPS = 1e-5          # PyTorch nn.LayerNorm default
LEAKY_SLOPE = 0.01     # PyTorch nn.LeakyReLU default
SOFTPLUS_EPS = 1e-7


def _layernorm(x, gamma, beta):
    mean = jnp.mean(x, axis=-1, keepdims=True)
    var = jnp.mean(jnp.square(x - mean), axis=-1, keepdims=True)
    xhat = (x - mean) * jax.lax.rsqrt(var + LN_EPS)
    return xhat * gamma + beta


def _leaky_relu(x):
    return jnp.where(x > 0, x, LEAKY_SLOPE * x)


def vae_encoder_kernel(x_ref, xbat_ref, eps_ref,
                       w1x_ref, w1b_ref, b1_ref, g1_ref, be1_ref,
                       w2_ref, b2_ref, g2_ref, be2_ref,
                       wbot_ref, bbot_ref,
                       out_ref):
    latent = eps_ref.shape[-1]

    # --- FCNN hidden layer 1: (fused concat) Linear -> LayerNorm -> LeakyReLU ---
    h = (jnp.dot(x_ref[...], w1x_ref[...], preferred_element_type=jnp.float32)
         + jnp.dot(xbat_ref[...], w1b_ref[...], preferred_element_type=jnp.float32)
         + b1_ref[...])
    h = _leaky_relu(_layernorm(h, g1_ref[...], be1_ref[...]))

    # --- FCNN hidden layer 2: Linear -> LayerNorm -> LeakyReLU ---
    h = jnp.dot(h, w2_ref[...], preferred_element_type=jnp.float32) + b2_ref[...]
    h = _leaky_relu(_layernorm(h, g2_ref[...], be2_ref[...]))

    # --- bottleneck: fused mu / sigma projection ---
    bot = jnp.dot(h, wbot_ref[...], preferred_element_type=jnp.float32) + bbot_ref[...]
    mu = bot[:, :latent]
    sigma = jax.nn.softplus(bot[:, latent:]) + SOFTPLUS_EPS

    # --- reparameterize ---
    z = mu + eps_ref[...] * sigma

    # one lane-dense store: [mu | sigma | z]
    out_ref[...] = jnp.concatenate([mu, sigma, z], axis=-1)


def vae_encoder_forward(x, x_batch, params, eps, tile_b=512):
    """Run the VAE encoder forward. Returns (mu, sigma, z, latent_lib=None)."""
    x = x.astype(jnp.float32)
    eps = eps.astype(jnp.float32)
    B, d_x = x.shape
    latent_dim = params["wmu"].shape[1]
    w1 = params["w1"]

    if x_batch is not None:
        x_batch = x_batch.astype(jnp.float32)
        w1x, w1b = w1[:d_x], w1[d_x:]
    else:
        # dummy zero-contribution batch-covariate path
        x_batch = jnp.zeros((B, 1), jnp.float32)
        w1x, w1b = w1, jnp.zeros((1, w1.shape[1]), jnp.float32)
    d_b = x_batch.shape[1]

    # fused bottleneck weights: [Wmu | Wsig], [bmu | bsig]
    wbot = jnp.concatenate([params["wmu"], params["wsig"]], axis=1)
    bbot = jnp.concatenate([params["bmu"], params["bsig"]], axis=1)

    # --- batch tiling (sublane-aligned), pad B up to a multiple of the tile ---
    tile_b = int(max(8, min(tile_b, -(-B // 8) * 8)))
    n_tiles = pl.cdiv(B, tile_b)
    B_pad = n_tiles * tile_b
    if B_pad != B:
        pad = B_pad - B
        x = jnp.pad(x, ((0, pad), (0, 0)))
        x_batch = jnp.pad(x_batch, ((0, pad), (0, 0)))
        eps = jnp.pad(eps, ((0, pad), (0, 0)))

    def row_spec(feat):
        # batch-tiled operand: new block each grid step
        return pl.BlockSpec((tile_b, feat), lambda i: (i, 0))

    def const_spec(arr):
        # parameter: constant block index -> stays resident in VMEM
        return pl.BlockSpec(arr.shape, lambda i: (0, 0))

    in_arrays = (x, x_batch, eps,
                 w1x, w1b, params["b1"], params["g1"], params["be1"],
                 params["w2"], params["b2"], params["g2"], params["be2"],
                 wbot, bbot)
    in_specs = [row_spec(d_x), row_spec(d_b), row_spec(latent_dim)] + \
               [const_spec(a) for a in in_arrays[3:]]

    packed = pl.pallas_call(
        vae_encoder_kernel,
        out_shape=jax.ShapeDtypeStruct((B_pad, 3 * latent_dim), jnp.float32),
        grid=(n_tiles,),
        in_specs=in_specs,
        out_specs=pl.BlockSpec((tile_b, 3 * latent_dim), lambda i: (i, 0)),
        compiler_params=pltpu.CompilerParams(
            dimension_semantics=("parallel",)),
    )(*in_arrays)

    mu = packed[:B, :latent_dim]
    sigma = packed[:B, latent_dim:2 * latent_dim]
    z = packed[:B, 2 * latent_dim:]
    latent_lib = None  # infer_library_size=False
    return mu, sigma, z, latent_lib


def init_params(key, input_dim, input_batch_num, hidden_dim, latent_dim):
    """Deterministic synthetic parameter init (shapes match the nn.Module)."""
    d_in = input_dim + input_batch_num
    h1, h2 = hidden_dim
    keys = jax.random.split(key, 8)

    def lin(k, fan_in, fan_out):
        kw, kb = jax.random.split(k)
        bound = 1.0 / jnp.sqrt(fan_in)
        w = jax.random.uniform(kw, (fan_in, fan_out), jnp.float32, -bound, bound)
        b = jax.random.uniform(kb, (1, fan_out), jnp.float32, -bound, bound)
        return w, b

    w1, b1 = lin(keys[0], d_in, h1)
    w2, b2 = lin(keys[1], h1, h2)
    wmu, bmu = lin(keys[2], h2, latent_dim)
    wsig, bsig = lin(keys[3], h2, latent_dim)

    return dict(
        w1=w1, b1=b1, g1=jnp.ones((1, h1), jnp.float32), be1=jnp.zeros((1, h1), jnp.float32),
        w2=w2, b2=b2, g2=jnp.ones((1, h2), jnp.float32), be2=jnp.zeros((1, h2), jnp.float32),
        wmu=wmu, bmu=bmu, wsig=wsig, bsig=bsig,
    )


if __name__ == "__main__":
    # Small shapes consistent with the module's forward.
    B = 8
    INPUT_DIM = 32
    INPUT_BATCH_NUM = 4
    HIDDEN_DIM = [64, 32]
    LATENT_DIM = 16

    root = jax.random.PRNGKey(0)
    k_par, k_x, k_xb, k_eps = jax.random.split(root, 4)

    params = init_params(k_par, INPUT_DIM, INPUT_BATCH_NUM, HIDDEN_DIM, LATENT_DIM)
    x = jax.random.normal(k_x, (B, INPUT_DIM), jnp.float32)
    x_batch = (jax.random.uniform(k_xb, (B, INPUT_BATCH_NUM)) > 0.5).astype(jnp.float32)
    eps = jax.random.normal(k_eps, (B, LATENT_DIM), jnp.float32)  # reparameterization noise
    # TODO(synk): eps could be generated in-kernel (pltpu.prng_seed + stateful_normal)
    # to drop one HBM stream; kept as an input here for deterministic verification.

    mu, sigma, z, latent_lib = vae_encoder_forward(x, x_batch, params, eps)
    jax.block_until_ready((mu, sigma, z))

    # Pure-JAX reference check (same math outside Pallas).
    xb = jnp.concatenate([x, x_batch], axis=1)
    h = xb @ params["w1"] + params["b1"]
    h = (h - h.mean(-1, keepdims=True)) * jax.lax.rsqrt(h.var(-1, keepdims=True) + LN_EPS)
    h = jnp.where(h > 0, h, LEAKY_SLOPE * h)
    h = h @ params["w2"] + params["b2"]
    h = (h - h.mean(-1, keepdims=True)) * jax.lax.rsqrt(h.var(-1, keepdims=True) + LN_EPS)
    h = jnp.where(h > 0, h, LEAKY_SLOPE * h)
    mu_ref = h @ params["wmu"] + params["bmu"]
    sigma_ref = jax.nn.softplus(h @ params["wsig"] + params["bsig"]) + SOFTPLUS_EPS
    z_ref = mu_ref + eps * sigma_ref
    assert jnp.allclose(mu, mu_ref, atol=1e-4), "mu mismatch"
    assert jnp.allclose(sigma, sigma_ref, atol=1e-4), "sigma mismatch"
    assert jnp.allclose(z, z_ref, atol=1e-4), "z mismatch"
    assert latent_lib is None

    print("KERNEL_OK")
</pallas_src>

<mosaic_0001>
module attributes {stable_mosaic.version = 11 : i64} {
  func.func @vae_encoder_kernel(%arg0: i32, %arg1: memref<8x32xf32, #tpu.memory_space<vmem>>, %arg2: memref<8x4xf32, #tpu.memory_space<vmem>>, %arg3: memref<8x16xf32, #tpu.memory_space<vmem>>, %arg4: memref<32x64xf32, #tpu.memory_space<vmem>>, %arg5: memref<4x64xf32, #tpu.memory_space<vmem>>, %arg6: memref<1x64xf32, #tpu.memory_space<vmem>>, %arg7: memref<1x64xf32, #tpu.memory_space<vmem>>, %arg8: memref<1x64xf32, #tpu.memory_space<vmem>>, %arg9: memref<64x32xf32, #tpu.memory_space<vmem>>, %arg10: memref<1x32xf32, #tpu.memory_space<vmem>>, %arg11: memref<1x32xf32, #tpu.memory_space<vmem>>, %arg12: memref<1x32xf32, #tpu.memory_space<vmem>>, %arg13: memref<32x32xf32, #tpu.memory_space<vmem>>, %arg14: memref<1x32xf32, #tpu.memory_space<vmem>>, %arg15: memref<8x48xf32, #tpu.memory_space<vmem>>) attributes {dimension_semantics = [#tpu.dimension_semantics<parallel>], iteration_bounds = array<i64: 1>, scalar_prefetch = 0 : i64, scratch_operands = 0 : i64, tpu.core_type = #tpu.core_type<tc>, window_params = [{transform_indices = @transform_0, window_bounds = array<i64: 8, 32>}, {transform_indices = @transform_1, window_bounds = array<i64: 8, 4>}, {transform_indices = @transform_2, window_bounds = array<i64: 8, 16>}, {pipeline_mode = #tpu.pipeline_mode<synchronous>, transform_indices = @transform_3, window_bounds = array<i64: 32, 64>}, {pipeline_mode = #tpu.pipeline_mode<synchronous>, transform_indices = @transform_4, window_bounds = array<i64: 4, 64>}, {pipeline_mode = #tpu.pipeline_mode<synchronous>, transform_indices = @transform_5, window_bounds = array<i64: 1, 64>}, {pipeline_mode = #tpu.pipeline_mode<synchronous>, transform_indices = @transform_6, window_bounds = array<i64: 1, 64>}, {pipeline_mode = #tpu.pipeline_mode<synchronous>, transform_indices = @transform_7, window_bounds = array<i64: 1, 64>}, {pipeline_mode = #tpu.pipeline_mode<synchronous>, transform_indices = @transform_8, window_bounds = array<i64: 64, 32>}, {pipeline_mode = #tpu.pipeline_mode<synchronous>, transform_indices = @transform_9, window_bounds = array<i64: 1, 32>}, {pipeline_mode = #tpu.pipeline_mode<synchronous>, transform_indices = @transform_10, window_bounds = array<i64: 1, 32>}, {pipeline_mode = #tpu.pipeline_mode<synchronous>, transform_indices = @transform_11, window_bounds = array<i64: 1, 32>}, {pipeline_mode = #tpu.pipeline_mode<synchronous>, transform_indices = @transform_12, window_bounds = array<i64: 32, 32>}, {pipeline_mode = #tpu.pipeline_mode<synchronous>, transform_indices = @transform_13, window_bounds = array<i64: 1, 32>}, {transform_indices = @transform_14, window_bounds = array<i64: 8, 48>}]} {
    %c0 = arith.constant 0 : index
    %c0_0 = arith.constant 0 : index
    %0 = vector.load %arg1[%c0, %c0_0] : memref<8x32xf32, #tpu.memory_space<vmem>>, vector<8x32xf32>
    %c0_1 = arith.constant 0 : index
    %c0_2 = arith.constant 0 : index
    %1 = vector.load %arg4[%c0_1, %c0_2] : memref<32x64xf32, #tpu.memory_space<vmem>>, vector<32x64xf32>
    %cst = arith.constant dense<0.000000e+00> : vector<8x64xf32>
    %2 = tpu.matmul %0, %1, %cst {dimension_numbers = #tpu.dot_dimension_numbers<[1], [0], [0], [1], [0, 0, 1, 1], [], []>} : vector<8x32xf32>, vector<32x64xf32>, vector<8x64xf32> -> vector<8x64xf32>
    %c0_3 = arith.constant 0 : index
    %c0_4 = arith.constant 0 : index
    %3 = vector.load %arg2[%c0_3, %c0_4] : memref<8x4xf32, #tpu.memory_space<vmem>>, vector<8x4xf32>
    %c0_5 = arith.constant 0 : index
    %c0_6 = arith.constant 0 : index
    %4 = vector.load %arg5[%c0_5, %c0_6] : memref<4x64xf32, #tpu.memory_space<vmem>>, vector<4x64xf32>
    %cst_7 = arith.constant dense<0.000000e+00> : vector<8x64xf32>
    %5 = tpu.matmul %3, %4, %cst_7 {dimension_numbers = #tpu.dot_dimension_numbers<[1], [0], [0], [1], [0, 0, 1, 1], [], []>} : vector<8x4xf32>, vector<4x64xf32>, vector<8x64xf32> -> vector<8x64xf32>
    %6 = arith.addf %2, %5 : vector<8x64xf32>
    %c0_8 = arith.constant 0 : index
    %c0_9 = arith.constant 0 : index
    %7 = vector.load %arg6[%c0_8, %c0_9] : memref<1x64xf32, #tpu.memory_space<vmem>>, vector<1x64xf32>
    %8 = vector.broadcast %7 : vector<1x64xf32> to vector<8x64xf32>
    %9 = arith.addf %6, %8 : vector<8x64xf32>
    %c0_10 = arith.constant 0 : index
    %c0_11 = arith.constant 0 : index
    %10 = vector.load %arg7[%c0_10, %c0_11] : memref<1x64xf32, #tpu.memory_space<vmem>>, vector<1x64xf32>
    %c0_12 = arith.constant 0 : index
    %c0_13 = arith.constant 0 : index
    %11 = vector.load %arg8[%c0_12, %c0_13] : memref<1x64xf32, #tpu.memory_space<vmem>>, vector<1x64xf32>
    %cst_14 = arith.constant dense<0.000000e+00> : vector<8xf32>
    %12 = vector.multi_reduction <add>, %9, %cst_14 [1] : vector<8x64xf32> to vector<8xf32>
    %13 = vector.shape_cast %12 : vector<8xf32> to vector<8x1xf32>
    %cst_15 = arith.constant 6.400000e+01 : f32
    %14 = vector.broadcast %cst_15 : f32 to vector<8x1xf32>
    %15 = arith.divf %13, %14 : vector<8x1xf32>
    %16 = vector.broadcast %15 : vector<8x1xf32> to vector<8x64xf32>
    %17 = arith.subf %9, %16 : vector<8x64xf32>
    %18 = arith.mulf %17, %17 : vector<8x64xf32>
    %cst_16 = arith.constant dense<0.000000e+00> : vector<8xf32>
    %19 = vector.multi_reduction <add>, %18, %cst_16 [1] : vector<8x64xf32> to vector<8xf32>
    %20 = vector.shape_cast %19 : vector<8xf32> to vector<8x1xf32>
    %cst_17 = arith.constant 6.400000e+01 : f32
    %21 = vector.broadcast %cst_17 : f32 to vector<8x1xf32>
    %22 = arith.divf %20, %21 : vector<8x1xf32>
    %23 = vector.broadcast %15 : vector<8x1xf32> to vector<8x64xf32>
    %24 = arith.subf %9, %23 : vector<8x64xf32>
    %cst_18 = arith.constant 9.99999974E-6 : f32
    %25 = vector.broadcast %cst_18 : f32 to vector<8x1xf32>
    %26 = arith.addf %22, %25 : vector<8x1xf32>
    %27 = math.rsqrt %26 : vector<8x1xf32>
    %28 = vector.broadcast %27 : vector<8x1xf32> to vector<8x64xf32>
    %29 = arith.mulf %24, %28 : vector<8x64xf32>
    %30 = vector.broadcast %10 : vector<1x64xf32> to vector<8x64xf32>
    %31 = arith.mulf %29, %30 : vector<8x64xf32>
    %32 = vector.broadcast %11 : vector<1x64xf32> to vector<8x64xf32>
    %33 = arith.addf %31, %32 : vector<8x64xf32>
    %cst_19 = arith.constant 0.000000e+00 : f32
    %34 = vector.broadcast %cst_19 : f32 to vector<8x64xf32>
    %35 = arith.cmpf ogt, %33, %34 : vector<8x64xf32>
    %cst_20 = arith.constant 0.00999999977 : f32
    %36 = vector.broadcast %cst_20 : f32 to vector<8x64xf32>
    %37 = arith.mulf %36, %33 : vector<8x64xf32>
    %38 = arith.select %35, %33, %37 : vector<8x64xi1>, vector<8x64xf32>
    %c0_21 = arith.constant 0 : index
    %c0_22 = arith.constant 0 : index
    %39 = vector.load %arg9[%c0_21, %c0_22] : memref<64x32xf32, #tpu.memory_space<vmem>>, vector<64x32xf32>
    %cst_23 = arith.constant dense<0.000000e+00> : vector<8x32xf32>
    %40 = tpu.matmul %38, %39, %cst_23 {dimension_numbers = #tpu.dot_dimension_numbers<[1], [0], [0], [1], [0, 0, 1, 1], [], []>} : vector<8x64xf32>, vector<64x32xf32>, vector<8x32xf32> -> vector<8x32xf32>
    %c0_24 = arith.constant 0 : index
    %c0_25 = arith.constant 0 : index
    %41 = vector.load %arg10[%c0_24, %c0_25] : memref<1x32xf32, #tpu.memory_space<vmem>>, vector<1x32xf32>
    %42 = vector.broadcast %41 : vector<1x32xf32> to vector<8x32xf32>
    %43 = arith.addf %40, %42 : vector<8x32xf32>
    %c0_26 = arith.constant 0 : index
    %c0_27 = arith.constant 0 : index
    %44 = vector.load %arg11[%c0_26, %c0_27] : memref<1x32xf32, #tpu.memory_space<vmem>>, vector<1x32xf32>
    %c0_28 = arith.constant 0 : index
    %c0_29 = arith.constant 0 : index
    %45 = vector.load %arg12[%c0_28, %c0_29] : memref<1x32xf32, #tpu.memory_space<vmem>>, vector<1x32xf32>
    %cst_30 = arith.constant dense<0.000000e+00> : vector<8xf32>
    %46 = vector.multi_reduction <add>, %43, %cst_30 [1] : vector<8x32xf32> to vector<8xf32>
    %47 = vector.shape_cast %46 : vector<8xf32> to vector<8x1xf32>
    %cst_31 = arith.constant 3.200000e+01 : f32
    %48 = vector.broadcast %cst_31 : f32 to vector<8x1xf32>
    %49 = arith.divf %47, %48 : vector<8x1xf32>
    %50 = vector.broadcast %49 : vector<8x1xf32> to vector<8x32xf32>
    %51 = arith.subf %43, %50 : vector<8x32xf32>
    %52 = arith.mulf %51, %51 : vector<8x32xf32>
    %cst_32 = arith.constant dense<0.000000e+00> : vector<8xf32>
    %53 = vector.multi_reduction <add>, %52, %cst_32 [1] : vector<8x32xf32> to vector<8xf32>
    %54 = vector.shape_cast %53 : vector<8xf32> to vector<8x1xf32>
    %cst_33 = arith.constant 3.200000e+01 : f32
    %55 = vector.broadcast %cst_33 : f32 to vector<8x1xf32>
    %56 = arith.divf %54, %55 : vector<8x1xf32>
    %57 = vector.broadcast %49 : vector<8x1xf32> to vector<8x32xf32>
    %58 = arith.subf %43, %57 : vector<8x32xf32>
    %cst_34 = arith.constant 9.99999974E-6 : f32
    %59 = vector.broadcast %cst_34 : f32 to vector<8x1xf32>
    %60 = arith.addf %56, %59 : vector<8x1xf32>
    %61 = math.rsqrt %60 : vector<8x1xf32>
    %62 = vector.broadcast %61 : vector<8x1xf32> to vector<8x32xf32>
    %63 = arith.mulf %58, %62 : vector<8x32xf32>
    %64 = vector.broadcast %44 : vector<1x32xf32> to vector<8x32xf32>
    %65 = arith.mulf %63, %64 : vector<8x32xf32>
    %66 = vector.broadcast %45 : vector<1x32xf32> to vector<8x32xf32>
    %67 = arith.addf %65, %66 : vector<8x32xf32>
    %cst_35 = arith.constant 0.000000e+00 : f32
    %68 = vector.broadcast %cst_35 : f32 to vector<8x32xf32>
    %69 = arith.cmpf ogt, %67, %68 : vector<8x32xf32>
    %cst_36 = arith.constant 0.00999999977 : f32
    %70 = vector.broadcast %cst_36 : f32 to vector<8x32xf32>
    %71 = arith.mulf %70, %67 : vector<8x32xf32>
    %72 = arith.select %69, %67, %71 : vector<8x32xi1>, vector<8x32xf32>
    %c0_37 = arith.constant 0 : index
    %c0_38 = arith.constant 0 : index
    %73 = vector.load %arg13[%c0_37, %c0_38] : memref<32x32xf32, #tpu.memory_space<vmem>>, vector<32x32xf32>
    %cst_39 = arith.constant dense<0.000000e+00> : vector<8x32xf32>
    %74 = tpu.matmul %72, %73, %cst_39 {dimension_numbers = #tpu.dot_dimension_numbers<[1], [0], [0], [1], [0, 0, 1, 1], [], []>} : vector<8x32xf32>, vector<32x32xf32>, vector<8x32xf32> -> vector<8x32xf32>
    %c0_40 = arith.constant 0 : index
    %c0_41 = arith.constant 0 : index
    %75 = vector.load %arg14[%c0_40, %c0_41] : memref<1x32xf32, #tpu.memory_space<vmem>>, vector<1x32xf32>
    %76 = vector.broadcast %75 : vector<1x32xf32> to vector<8x32xf32>
    %77 = arith.addf %74, %76 : vector<8x32xf32>
    %78 = vector.extract_strided_slice %77 {offsets = [0, 0], sizes = [8, 16], strides = [1, 1]} : vector<8x32xf32> to vector<8x16xf32>
    %79 = vector.extract_strided_slice %77 {offsets = [0, 16], sizes = [8, 16], strides = [1, 1]} : vector<8x32xf32> to vector<8x16xf32>
    %cst_42 = arith.constant 0.000000e+00 : f32
    %80 = vector.broadcast %cst_42 : f32 to vector<8x16xf32>
    %81 = arith.maximumf %79, %80 : vector<8x16xf32>
    %82 = vector.broadcast %cst_42 : f32 to vector<8x16xf32>
    %83 = arith.subf %79, %82 : vector<8x16xf32>
    %84 = arith.cmpf one, %83, %83 : vector<8x16xf32>
    %85 = vector.broadcast %cst_42 : f32 to vector<8x16xf32>
    %86 = arith.addf %79, %85 : vector<8x16xf32>
    %87 = math.absf %83 : vector<8x16xf32>
    %cst_43 = arith.constant 0.000000e+00 : f32
    %88 = vector.broadcast %cst_43 : f32 to vector<8x16xf32>
    %89 = arith.subf %88, %87 : vector<8x16xf32>
    %90 = math.exp %89 : vector<8x16xf32>
    %91 = math.log1p %90 : vector<8x16xf32>
    %92 = arith.addf %81, %91 : vector<8x16xf32>
    %93 = arith.select %84, %86, %92 : vector<8x16xi1>, vector<8x16xf32>
    %cst_44 = arith.constant 1.000000e-07 : f32
    %94 = vector.broadcast %cst_44 : f32 to vector<8x16xf32>
    %95 = arith.addf %93, %94 : vector<8x16xf32>
    %c0_45 = arith.constant 0 : index
    %c0_46 = arith.constant 0 : index
    %96 = vector.load %arg3[%c0_45, %c0_46] : memref<8x16xf32, #tpu.memory_space<vmem>>, vector<8x16xf32>
    %97 = arith.mulf %96, %95 : vector<8x16xf32>
    %98 = arith.addf %78, %97 : vector<8x16xf32>
    %99 = tpu.concatenate %78, %95, %98 in 1 : vector<8x16xf32>, vector<8x16xf32>, vector<8x16xf32> -> vector<8x48xf32>
    %c0_47 = arith.constant 0 : index
    %c0_48 = arith.constant 0 : index
    %100 = vector.load %arg15[%c0_47, %c0_48] : memref<8x48xf32, #tpu.memory_space<vmem>>, vector<8x48xf32>
    tpu.vector_store %arg15[%c0_47, %c0_48], %99 {strides = array<i32>} : memref<8x48xf32, #tpu.memory_space<vmem>>, vector<8x48xf32>,
    return
  }
  func.func @transform_0(%arg0: i32) -> (i32, i32) {
    %c0_i32 = arith.constant 0 : i32
    %c0_i32_0 = arith.constant 0 : i32
    return %arg0, %c0_i32 : i32, i32
  }
  func.func @transform_1(%arg0: i32) -> (i32, i32) {
    %c0_i32 = arith.constant 0 : i32
    %c0_i32_0 = arith.constant 0 : i32
    return %arg0, %c0_i32 : i32, i32
  }
  func.func @transform_2(%arg0: i32) -> (i32, i32) {
    %c0_i32 = arith.constant 0 : i32
    %c0_i32_0 = arith.constant 0 : i32
    return %arg0, %c0_i32 : i32, i32
  }
  func.func @transform_3(%arg0: i32) -> (i32, i32) {
    %c0_i32 = arith.constant 0 : i32
    %c0_i32_0 = arith.constant 0 : i32
    %c0_i32_1 = arith.constant 0 : i32
    return %c0_i32, %c0_i32_0 : i32, i32
  }
  func.func @transform_4(%arg0: i32) -> (i32, i32) {
    %c0_i32 = arith.constant 0 : i32
    %c0_i32_0 = arith.constant 0 : i32
    %c0_i32_1 = arith.constant 0 : i32
    return %c0_i32, %c0_i32_0 : i32, i32
  }
  func.func @transform_5(%arg0: i32) -> (i32, i32) {
    %c0_i32 = arith.constant 0 : i32
    %c0_i32_0 = arith.constant 0 : i32
    %c0_i32_1 = arith.constant 0 : i32
    return %c0_i32, %c0_i32_0 : i32, i32
  }
  func.func @transform_6(%arg0: i32) -> (i32, i32) {
    %c0_i32 = arith.constant 0 : i32
    %c0_i32_0 = arith.constant 0 : i32
    %c0_i32_1 = arith.constant 0 : i32
    return %c0_i32, %c0_i32_0 : i32, i32
  }
  func.func @transform_7(%arg0: i32) -> (i32, i32) {
    %c0_i32 = arith.constant 0 : i32
    %c0_i32_0 = arith.constant 0 : i32
    %c0_i32_1 = arith.constant 0 : i32
    return %c0_i32, %c0_i32_0 : i32, i32
  }
  func.func @transform_8(%arg0: i32) -> (i32, i32) {
    %c0_i32 = arith.constant 0 : i32
    %c0_i32_0 = arith.constant 0 : i32
    %c0_i32_1 = arith.constant 0 : i32
    return %c0_i32, %c0_i32_0 : i32, i32
  }
  func.func @transform_9(%arg0: i32) -> (i32, i32) {
    %c0_i32 = arith.constant 0 : i32
    %c0_i32_0 = arith.constant 0 : i32
    %c0_i32_1 = arith.constant 0 : i32
    return %c0_i32, %c0_i32_0 : i32, i32
  }
  func.func @transform_10(%arg0: i32) -> (i32, i32) {
    %c0_i32 = arith.constant 0 : i32
    %c0_i32_0 = arith.constant 0 : i32
    %c0_i32_1 = arith.constant 0 : i32
    return %c0_i32, %c0_i32_0 : i32, i32
  }
  func.func @transform_11(%arg0: i32) -> (i32, i32) {
    %c0_i32 = arith.constant 0 : i32
    %c0_i32_0 = arith.constant 0 : i32
    %c0_i32_1 = arith.constant 0 : i32
    return %c0_i32, %c0_i32_0 : i32, i32
  }
  func.func @transform_12(%arg0: i32) -> (i32, i32) {
    %c0_i32 = arith.constant 0 : i32
    %c0_i32_0 = arith.constant 0 : i32
    %c0_i32_1 = arith.constant 0 : i32
    return %c0_i32, %c0_i32_0 : i32, i32
  }
  func.func @transform_13(%arg0: i32) -> (i32, i32) {
    %c0_i32 = arith.constant 0 : i32
    %c0_i32_0 = arith.constant 0 : i32
    %c0_i32_1 = arith.constant 0 : i32
    return %c0_i32, %c0_i32_0 : i32, i32
  }
  func.func @transform_14(%arg0: i32) -> (i32, i32) {
    %c0_i32 = arith.constant 0 : i32
    %c0_i32_0 = arith.constant 0 : i32
    return %arg0, %c0_i32 : i32, i32
  }
}

</mosaic_0001>

<llo_original>
// kernel: tpu_custom_call.1
$region0: #{tpu_custom_call.1}
  #allocation0 [shape = 'u32[]', space=smem, size = 0x4, offset = 0x4, fixed_abs, tag = 'smem constant byte address 0x4 - core index']
  #allocation1 [shape = 'u32[72,128]{1,0:T(1,128)}', space=vmem, size = 0x9000, scoped, tag = 'internal scratch']
  %s0 = inlined_call_operand.vmem [shape: f32[8,32], index: 0, kind: input, shape index: {}]
  %s1 = inlined_call_operand.vmem [shape: f32[8,4], index: 1, kind: input, shape index: {}]
  %s2 = inlined_call_operand.vmem [shape: f32[8,16], index: 2, kind: input, shape index: {}]
  %s3 = inlined_call_operand.vmem [shape: f32[32,64], index: 3, kind: input, shape index: {}]
  %s4 = inlined_call_operand.vmem [shape: f32[4,64], index: 4, kind: input, shape index: {}]
  %s5 = inlined_call_operand.vmem [shape: f32[1,64], index: 5, kind: input, shape index: {}]
  %s6 = inlined_call_operand.vmem [shape: f32[1,64], index: 6, kind: input, shape index: {}]
  %s7 = inlined_call_operand.vmem [shape: f32[1,64], index: 7, kind: input, shape index: {}]
  %s8 = inlined_call_operand.vmem [shape: f32[64,32], index: 8, kind: input, shape index: {}]
  %s9 = inlined_call_operand.vmem [shape: f32[1,32], index: 9, kind: input, shape index: {}]
  %s10 = inlined_call_operand.vmem [shape: f32[1,32], index: 10, kind: input, shape index: {}]
  %s11 = inlined_call_operand.vmem [shape: f32[1,32], index: 11, kind: input, shape index: {}]
  %s12 = inlined_call_operand.vmem [shape: f32[32,32], index: 12, kind: input, shape index: {}]
  %s13 = inlined_call_operand.vmem [shape: f32[1,32], index: 13, kind: input, shape index: {}]
  %s14 = inlined_call_operand.hbm [shape: f32[8,48], index: 14, kind: output, shape index: {}]
  %s15 = sld [smem:[#allocation0]]
  $region66: #{tpu_custom_call.1} parent=0
    _
  %s17 = ssub.s32 1, %s15
  %s18 = scalar_select 0, %s17, %s15
  $region1: #{tpu_custom_call.1} parent=0
    #allocation2 [shape = 'u8[4096]{0}', space=vmem, size = 0x1000, scoped, tag = 'output window, operand 0, single buffered']
    #allocation3 [shape = 's32[1]{0}', space=sflag, size = 0x4, scoped, tag = 'scoped memory for tpu_custom_call.1']
    %19 = vsyncpa [#allocation3], 0
    // Predicated region
    $region2: #{tpu_custom_call.1} parent=1 // pred_check
      _
    $region3: #{tpu_custom_call.1} parent=1 // pred_check_branch
      %21 = sbr.rel (0) target = $region5
    $region4: #{tpu_custom_call.1} parent=1 // pred_region
      _
    $region5: #{tpu_custom_call.1} parent=1 // pred_fallthru
      _
    // Predicated region
    $region6: #{tpu_custom_call.1} parent=1 // pred_check
      _
    $region7: #{tpu_custom_call.1} parent=1 // pred_check_branch
      %23 = sbr.rel (0) target = $region9
    $region8: #{tpu_custom_call.1} parent=1 // pred_region
      _
    $region9: #{tpu_custom_call.1} parent=1 // pred_fallthru
      _
    // Predicated region
    $region10: #{tpu_custom_call.1} parent=1 // pred_check
      _
    $region11: #{tpu_custom_call.1} parent=1 // pred_check_branch
      %25 = sbr.rel (0) target = $region13
    $region12: #{tpu_custom_call.1} parent=1 // pred_region
      _
    $region13: #{tpu_custom_call.1} parent=1 // pred_fallthru
      _
    // Predicated region
    $region14: #{tpu_custom_call.1} parent=1 // pred_check
      _
    $region15: #{tpu_custom_call.1} parent=1 // pred_check_branch
      %27 = sbr.rel (0) target = $region17
    $region16: #{tpu_custom_call.1} parent=1 // pred_region
      _
    $region17: #{tpu_custom_call.1} parent=1 // pred_fallthru
      _
    // Predicated region
    $region18: #{tpu_custom_call.1} parent=1 // pred_check
      _
    $region19: #{tpu_custom_call.1} parent=1 // pred_check_branch
      %29 = sbr.rel (0) target = $region21
    $region20: #{tpu_custom_call.1} parent=1 // pred_region
      _
    $region21: #{tpu_custom_call.1} parent=1 // pred_fallthru
      _
    // Predicated region
    $region22: #{tpu_custom_call.1} parent=1 // pred_check
      _
    $region23: #{tpu_custom_call.1} parent=1 // pred_check_branch
      %31 = sbr.rel (0) target = $region25
    $region24: #{tpu_custom_call.1} parent=1 // pred_region
      _
    $region25: #{tpu_custom_call.1} parent=1 // pred_fallthru
      _
    // Predicated region
    $region26: #{tpu_custom_call.1} parent=1 // pred_check
      _
    $region27: #{tpu_custom_call.1} parent=1 // pred_check_branch
      %33 = sbr.rel (0) target = $region29
    $region28: #{tpu_custom_call.1} parent=1 // pred_region
      _
    $region29: #{tpu_custom_call.1} parent=1 // pred_fallthru
      _
    // Predicated region
    $region30: #{tpu_custom_call.1} parent=1 // pred_check
      _
    $region31: #{tpu_custom_call.1} parent=1 // pred_check_branch
      %35 = sbr.rel (0) target = $region33
    $region32: #{tpu_custom_call.1} parent=1 // pred_region
      _
    $region33: #{tpu_custom_call.1} parent=1 // pred_fallthru
      _
    // Predicated region
    $region34: #{tpu_custom_call.1} parent=1 // pred_check
      _
    $region35: #{tpu_custom_call.1} parent=1 // pred_check_branch
      %37 = sbr.rel (0) target = $region37
    $region36: #{tpu_custom_call.1} parent=1 // pred_region
      _
    $region37: #{tpu_custom_call.1} parent=1 // pred_fallthru
      _
    // Predicated region
    $region38: #{tpu_custom_call.1} parent=1 // pred_check
      _
    $region39: #{tpu_custom_call.1} parent=1 // pred_check_branch
      %39 = sbr.rel (0) target = $region41
    $region40: #{tpu_custom_call.1} parent=1 // pred_region
      _
    $region41: #{tpu_custom_call.1} parent=1 // pred_fallthru
      _
    // Predicated region
    $region42: #{tpu_custom_call.1} parent=1 // pred_check
      _
    $region43: #{tpu_custom_call.1} parent=1 // pred_check_branch
      %41 = sbr.rel (0) target = $region45
    $region44: #{tpu_custom_call.1} parent=1 // pred_region
      _
    $region45: #{tpu_custom_call.1} parent=1 // pred_fallthru
      _
    // Predicated region
    $region46: #{tpu_custom_call.1} parent=1 // pred_check
      _
    $region47: #{tpu_custom_call.1} parent=1 // pred_check_branch
      %43 = sbr.rel (0) target = $region49
    $region48: #{tpu_custom_call.1} parent=1 // pred_region
      _
    $region49: #{tpu_custom_call.1} parent=1 // pred_fallthru
      _
    // Predicated region
    $region50: #{tpu_custom_call.1} parent=1 // pred_check
      _
    $region51: #{tpu_custom_call.1} parent=1 // pred_check_branch
      %45 = sbr.rel (0) target = $region53
    $region52: #{tpu_custom_call.1} parent=1 // pred_region
      _
    $region53: #{tpu_custom_call.1} parent=1 // pred_fallthru
      _
    // Predicated region
    $region54: #{tpu_custom_call.1} parent=1 // pred_check
      _
    $region55: #{tpu_custom_call.1} parent=1 // pred_check_branch
      %47 = sbr.rel (0) target = $region57
    $region56: #{tpu_custom_call.1} parent=1 // pred_region
      _
    $region57: #{tpu_custom_call.1} parent=1 // pred_fallthru
      _
    %v48 = vld [vmem:[%s0] sm:$0xff]
    %v49 = vld [vmem:[%s3] sm:$0xff]
    %v50 = vld [vmem:[%s3 + $0x8] sm:$0xff]
    %v51 = vld [vmem:[%s3 + $0x10] sm:$0xff]
    %v52 = vld [vmem:[%s3 + $0x18] sm:$0xff]
    %v53 = vld [vmem:[%s1] sm:$0xff]
    %v54 = vld [vmem:[%s4] sm:$0xf]
    %vm55 = vcmask 31744
    %v57 = vsel %vm55, %v53, 0
    %vm59 = vcmask 1043456
    %v61 = vsel %vm59, %v54, 0
    %63 = vmatpush.msra.mxu0 0.0
    %64 = vmatpush.msra.mxu0 0.0
    %65 = vmatpush.msra.mxu0 0.0
    %66 = vmatpush.msra.mxu0 0.0
    %67 = vmatpush.msra.mxu0 0.0
    %68 = vmatpush.msra.mxu0 0.0
    %69 = vmatpush.msra.mxu0 0.0
    %70 = vmatpush.msra.mxu0 0.0
    %71 = vmatpush.msra.mxu0 0.0
    %72 = vmatpush.msra.mxu0 0.0
    %73 = vmatpush.msra.mxu0 0.0
    %74 = vmatpush.msra.mxu0 0.0
    %75 = vmatpush.msra.mxu0 0.0
    %76 = vmatpush.msra.mxu0 0.0
    %77 = vmatpush.msra.mxu0 0.0
    %78 = vmatpush.msra.mxu0 %v61
    %79 = vmatmul.f32.gmra.mxu0 %v57
    %v80 = vpop.f32.mrf.mxu0
    %v81 = vadd.f32 0.0, %v80
    %82 = vdwg.mxu0
    %vm83 = vcmask 261120
    %v85 = vsel %vm83, %v48, 0
    %87 = vmatpush.msra.mxu0 0.0
    %88 = vmatpush.msra.mxu0 0.0
    %89 = vmatpush.msra.mxu0 0.0
    %90 = vmatpush.msra.mxu0 0.0
    %91 = vmatpush.msra.mxu0 0.0
    %92 = vmatpush.msra.mxu0 0.0
    %93 = vmatpush.msra.mxu0 0.0
    %94 = vmatpush.msra.mxu0 0.0
    %95 = vmatpush.msra.mxu0 0.0
    %96 = vmatpush.msra.mxu0 0.0
    %97 = vmatpush.msra.mxu0 0.0
    %98 = vmatpush.msra.mxu0 0.0
    %99 = vmatpush.msra.mxu0 %v52
    %100 = vmatpush.msra.mxu0 %v51
    %101 = vmatpush.msra.mxu0 %v50
    %102 = vmatpush.msra.mxu0 %v49
    %103 = vmatmul.f32.gmra.mxu0 %v85
    %v104 = vpop.f32.mrf.mxu0
    %v105 = vadd.f32 %v81, %v104
    %106 = vdwg.mxu0
    %v107 = vld [vmem:[%s5] sm:$0x1]
    %v109 = vperm.slane %v107, 0
    %v111 = vadd.f32 %v105, %v109
    %v112 = vld [vmem:[%s6] sm:$0x1]
    %v113 = vld [vmem:[%s7] sm:$0x1]
    %vm114 = vcmask 523264
    %v115 = vsel %vm114, %v111, 0.0
    %116 = vadd.xlane.f32.xlu0 %v115
    %v117 = vpop.xlane.xlu0 %116
    %v118 = vrcp.pop 64.0
    %v119 = vmul.f32 64.0, %v118
    %v120 = vsub.f32 1.0, %v119
    %v121 = vmul.f32 %v118, %v120
    %v122 = vadd.f32 %v118, %v121
    %vm123 = vweird.f32 %v118
    %v124 = vsel %vm123, %v118, %v122
    %v125 = vmul.f32 %v117, %v124
    %v126 = vsub.f32 %v111, %v125
    %v127 = vmul.f32 %v126, %v126
    %v128 = vsel %vm114, %v127, 0.0
    %129 = vadd.xlane.f32.xlu0 %v128
    %v130 = vpop.xlane.xlu0 %129
    %v131 = vmul.f32 %v130, %v124
    %v132 = vadd.f32 %v131, 1e-05
    %v133 = vrsqrt.pop %v132
    %v134 = vmul.f32 %v133, %v132
    %v135 = vmul.f32 %v134, %v133
    %v136 = vmul.f32 0.5, %v135
    %v137 = vsub.f32 1.5, %v136
    %v138 = vmul.f32 %v133, %v137
    %vm139 = vweird.f32 %v132
    %vm140 = vweird.f32 %v133
    %vm141 = vmor %vm139, %vm140
    %v142 = vsel %vm141, %v133, %v138
    %v143 = vmul.f32 %v126, %v142
    %v145 = vperm.slane %v112, 0
    %v147 = vmul.f32 %v143, %v145
    %v149 = vperm.slane %v113, 0
    %v151 = vadd.f32 %v147, %v149
    %vm152 = vcmp.gt.f32.partialorder %v151, 0.0
    %v153 = vmul.f32 %v151, 0.01
    %v154 = vsel %vm152, %v151, %v153
    %v155 = vld [vmem:[%s8] sm:$0xff]
    %v156 = vld [vmem:[%s8 + $0x8] sm:$0xff]
    %v157 = vld [vmem:[%s8 + $0x10] sm:$0xff]
    %v158 = vld [vmem:[%s8 + $0x18] sm:$0xff]
    %v159 = vld [vmem:[%s8 + $0x20] sm:$0xff]
    %v160 = vld [vmem:[%s8 + $0x28] sm:$0xff]
    %v161 = vld [vmem:[%s8 + $0x30] sm:$0xff]
    %v162 = vld [vmem:[%s8 + $0x38] sm:$0xff]
    %v163 = vld [vmem:[%s9] sm:$0x1]
    %v165 = vperm.slane %v163, 0
    %v168 = vsel %vm114, %v154, 0
    %170 = vmatpush.msra.mxu0 0.0
    %171 = vmatpush.msra.mxu0 0.0
    %172 = vmatpush.msra.mxu0 0.0
    %173 = vmatpush.msra.mxu0 0.0
    %174 = vmatpush.msra.mxu0 0.0
    %175 = vmatpush.msra.mxu0 0.0
    %176 = vmatpush.msra.mxu0 0.0
    %177 = vmatpush.msra.mxu0 0.0
    %178 = vmatpush.msra.mxu0 %v162
    %179 = vmatpush.msra.mxu0 %v161
    %180 = vmatpush.msra.mxu0 %v160
    %181 = vmatpush.msra.mxu0 %v159
    %182 = vmatpush.msra.mxu0 %v158
    %183 = vmatpush.msra.mxu0 %v157
    %184 = vmatpush.msra.mxu0 %v156
    %185 = vmatpush.msra.mxu0 %v155
    %186 = vmatmul.f32.gmra.mxu0 %v168
    %v187 = vpop.f32.mrf.mxu0
    %v188 = vadd.f32 %v165, %v187
    %189 = vdwg.mxu0
    %v190 = vld [vmem:[%s10] sm:$0x1]
    %v191 = vld [vmem:[%s11] sm:$0x1]
    %v192 = vsel %vm83, %v188, 0.0
    %193 = vadd.xlane.f32.xlu0 %v192
    %v194 = vpop.xlane.xlu0 %193
    %v195 = vrcp.pop 32.0
    %v196 = vmul.f32 32.0, %v195
    %v197 = vsub.f32 1.0, %v196
    %v198 = vmul.f32 %v195, %v197
    %v199 = vadd.f32 %v195, %v198
    %vm200 = vweird.f32 %v195
    %v201 = vsel %vm200, %v195, %v199
    %v202 = vmul.f32 %v194, %v201
    %v203 = vsub.f32 %v188, %v202
    %v204 = vmul.f32 %v203, %v203
    %v205 = vsel %vm83, %v204, 0.0
    %206 = vadd.xlane.f32.xlu0 %v205
    %v207 = vpop.xlane.xlu0 %206
    %v208 = vmul.f32 %v207, %v201
    %v209 = vadd.f32 %v208, 1e-05
    %v210 = vrsqrt.pop %v209
    %v211 = vmul.f32 %v210, %v209
    %v212 = vmul.f32 %v211, %v210
    %v213 = vmul.f32 0.5, %v212
    %v214 = vsub.f32 1.5, %v213
    %v215 = vmul.f32 %v210, %v214
    %vm216 = vweird.f32 %v209
    %vm217 = vweird.f32 %v210
    %vm218 = vmor %vm216, %vm217
    %v219 = vsel %vm218, %v210, %v215
    %v220 = vmul.f32 %v203, %v219
    %v222 = vperm.slane %v190, 0
    %v224 = vmul.f32 %v220, %v222
    %v226 = vperm.slane %v191, 0
    %v228 = vadd.f32 %v224, %v226
    %vm229 = vcmp.gt.f32.partialorder %v228, 0.0
    %v230 = vmul.f32 %v228, 0.01
    %v231 = vsel %vm229, %v228, %v230
    %v232 = vld [vmem:[%s12] sm:$0xff]
    %v233 = vld [vmem:[%s12 + $0x8] sm:$0xff]
    %v234 = vld [vmem:[%s12 + $0x10] sm:$0xff]
    %v235 = vld [vmem:[%s12 + $0x18] sm:$0xff]
    %v236 = vld [vmem:[%s13] sm:$0x1]
    %v238 = vperm.slane %v236, 0
    %v241 = vsel %vm83, %v231, 0
    %243 = vmatpush.msra.mxu0 0.0
    %244 = vmatpush.msra.mxu0 0.0
    %245 = vmatpush.msra.mxu0 0.0
    %246 = vmatpush.msra.mxu0 0.0
    %247 = vmatpush.msra.mxu0 0.0
    %248 = vmatpush.msra.mxu0 0.0
    %249 = vmatpush.msra.mxu0 0.0
    %250 = vmatpush.msra.mxu0 0.0
    %251 = vmatpush.msra.mxu0 0.0
    %252 = vmatpush.msra.mxu0 0.0
    %253 = vmatpush.msra.mxu0 0.0
    %254 = vmatpush.msra.mxu0 0.0
    %255 = vmatpush.msra.mxu0 %v235
    %256 = vmatpush.msra.mxu0 %v234
    %257 = vmatpush.msra.mxu0 %v233
    %258 = vmatpush.msra.mxu0 %v232
    %259 = vmatmul.f32.gmra.mxu0 %v241
    %v260 = vpop.f32.mrf.mxu0
    %v261 = vadd.f32 %v238, %v260
    %262 = vdwg.mxu0
    %v263 = vmax.f32 %v261, 0.0
    %vm264 = vcmp.ne.f32.partialorder %v261, %v261
    %v265 = vadd.f32 %v261, 0.0
    %v266 = vand.u32 2147483647, %v261
    %v267 = vsub.f32 0.0, %v266
    %v268 = vmul.f32 %v267, 1.442695
    %v269 = vpow.pop %v268
    %v270 = vadd.f32 %v269, 1.0
    %v271 = vlog2.pop %v270
    %v272 = vmul.f32 %v271, 0.6931472
    %v273 = vmul.f32 -0.5, %v269
    %v274 = vadd.f32 %v273, 1.0
    %v275 = vmul.f32 %v274, %v269
    %v276 = vand.u32 2147483647, %v269
    %vm277 = vcmp.lt.f32.partialorder %v276, 0.0004427343
    %v278 = vsel %vm277, %v275, %v272
    %v279 = vadd.f32 %v263, %v278
    %v280 = vsel %vm264, %v265, %v279
    %v281 = vadd.f32 %v280, 1e-07
    %v282 = vld [vmem:[%s2] sm:$0xff]
    %284 = vrot.lane.b32.xlu0 %v281, 112
    %v285 = vpop.permute.xlu0 %284
    %v287 = vmul.f32 %v282, %v285
    %v288 = vadd.f32 %v261, %v287
    %290 = vrot.lane.b32.xlu0 %v288, 32
    %v291 = vpop.permute.xlu0 %290
    %vm293 = vcmask 130048
    %v294 = vsel %vm293, %v261, %v281
    %v295 = vsel %vm83, %v294, %v291
    %vm296 = vcmask 392192
    %297 = vst.msk [vmem:[#allocation2] sm:$0xff] %vm296, %v295
    // Predicated region
    $region58: #{tpu_custom_call.1} parent=1 // pred_check
      _
    $region59: #{tpu_custom_call.1} parent=1 // pred_check_branch
      %299 = sbr.rel (0) target = $region61
    $region60: #{tpu_custom_call.1} parent=1 // pred_region
      %301 = vsyncadd [#allocation3], 0
      %s303 = sshll.u32 [#allocation2], 4
      %s304 = int_to_ptr.vmem [resolvable:$true] %s303
      %s305 = sshll.u32 %s14, 4
      %s306 = int_to_ptr.hbm [resolvable:$true] %s305
      %308 = dma.vmem_to_hbm [thread:$0]  %s304, 128, %s306, [#allocation3]
    $region61: #{tpu_custom_call.1} parent=1 // pred_fallthru
      _
    // Predicated region
    $region62: #{tpu_custom_call.1} parent=1 // pred_check
      _
    $region63: #{tpu_custom_call.1} parent=1 // pred_check_branch
      %310 = sbr.rel (0) target = $region65
    $region64: #{tpu_custom_call.1} parent=1 // pred_region
      %312 = dma.done [#allocation3], 128
    $region65: #{tpu_custom_call.1} parent=1 // pred_fallthru
      _
    %313 = vsyncpa [#allocation3], 1

</llo_original>
